<compile_context>
chip_gen: v6e
topology: v6e:2x2x1
jax: 0.10.0
libtpu: 0.0.40
codegen_flags: <defaults>
</compile_context>

<pallas_src>
import functools

import jax
import jax.numpy as jnp
from jax.experimental import pallas as pl
from jax.experimental.pallas import tpu as pltpu

_VMEM_BUDGET = 12 * 1024 * 1024  # conservative: fits v5e's 16 MiB scoped default


def _round_up(a, b):
    return (a + b - 1) // b * b


def _divisor_tile(dim, cap, align):
    """Largest multiple of `align` that divides `dim` and is <= cap (dim % align == 0)."""
    cap = max(align, min(cap, dim))
    best = align
    t = align
    while t <= cap:
        if dim % t == 0:
            best = t
        t += align
    return best


# ---------------------------------------------------------------------------
# Kernels
# ---------------------------------------------------------------------------
def _logistic_kernel_single_k(x_ref, w_ref, b_ref, o_ref):
    """Whole K reduction in one block: dot + bias + sigmoid straight to o_ref."""
    # x_ref: (tm, K)   w_ref: (K, tn)   b_ref: (1, tn)   o_ref: (tm, tn)
    z = jax.lax.dot_general(
        x_ref[...], w_ref[...],
        dimension_numbers=(((1,), (0,)), ((), ())),
        preferred_element_type=jnp.float32,
    ) + b_ref[...].astype(jnp.float32)
    # sigmoid(z) = 0.5 * tanh(0.5*z) + 0.5 : single exact EUP op.
    o_ref[...] = (0.5 * jnp.tanh(0.5 * z) + 0.5).astype(o_ref.dtype)


def _logistic_kernel_multi_k(x_ref, w_ref, b_ref, o_ref, acc_ref):
    """K split across grid axis 2: f32 VMEM accumulator with init/finalize."""
    k = pl.program_id(2)

    @pl.when(k == 0)
    def _():
        acc_ref[...] = jnp.zeros_like(acc_ref)

    acc_ref[...] += jax.lax.dot_general(
        x_ref[...], w_ref[...],
        dimension_numbers=(((1,), (0,)), ((), ())),
        preferred_element_type=jnp.float32,
    )

    @pl.when(k == pl.num_programs(2) - 1)
    def _():
        z = acc_ref[...] + b_ref[...].astype(jnp.float32)
        o_ref[...] = (0.5 * jnp.tanh(0.5 * z) + 0.5).astype(o_ref.dtype)


# ---------------------------------------------------------------------------
# Parameter prep (done once, outside the forward)
# ---------------------------------------------------------------------------
def prepare_logistic_params(weight, bias):
    """Pad + pre-transpose nn.Linear params to kernel layout.

    weight: (out_dim, in_dim)  ->  (K_pad, N_pad)  lane-dense, transposed
    bias:   (out_dim,)         ->  (1, N_pad)
    """
    out_dim, in_dim = weight.shape
    k_p = _round_up(in_dim, 128)
    n_p = _round_up(out_dim, 128)
    w_kn = jnp.zeros((k_p, n_p), weight.dtype).at[:in_dim, :out_dim].set(weight.T)
    b_row = jnp.zeros((1, n_p), bias.dtype).at[0, :out_dim].set(bias)
    return w_kn, b_row


def init_logistic_params(key, in_dim, out_dim, dtype=jnp.float32):
    """nn.Linear-style init: U(-1/sqrt(in_dim), 1/sqrt(in_dim))."""
    kw, kb = jax.random.split(key)
    bound = 1.0 / jnp.sqrt(jnp.float32(in_dim))
    weight = jax.random.uniform(kw, (out_dim, in_dim), jnp.float32, -bound, bound)
    bias = jax.random.uniform(kb, (out_dim,), jnp.float32, -bound, bound)
    return weight.astype(dtype), bias.astype(dtype)


# ---------------------------------------------------------------------------
# Forward
# ---------------------------------------------------------------------------
@functools.partial(jax.jit,
                   static_argnames=("out_dim", "tile_m", "tile_n", "tile_k"))
def logistic_forward(x, w_kn, b_row, *, out_dim,
                     tile_m=512, tile_n=512, tile_k=2048):
    """sigmoid(x.reshape(N, -1) @ W.T + b) with W pre-laid-out by prepare_logistic_params."""
    n = x.shape[0]
    x2d = x.reshape(n, -1)                    # flatten only; keep input dtype
    in_dim = x2d.shape[1]
    k_p, n_p = w_kn.shape
    assert k_p == _round_up(in_dim, 128), "params were prepared for a different in_dim"
    m_p = _round_up(n, 8)
    out_dtype = x2d.dtype

    x_it = x2d.dtype.itemsize
    w_it = w_kn.dtype.itemsize
    o_it = jnp.dtype(out_dtype).itemsize

    # --- tile selection -----------------------------------------------------
    # K: whole reduction in one block when it fits the cap (collapses K grid).
    tk = k_p if k_p <= tile_k else _divisor_tile(k_p, tile_k, 128)
    # M: cover the full padded batch when possible -> weight streamed once.
    tm = m_p if m_p <= tile_m else _divisor_tile(m_p, tile_m, 8)
    # N: lane-dense divisor of the padded output dim.
    tn = _divisor_tile(n_p, tile_n, 128)

    # v7x (2 TCs): if M doesn't split, try to split N so both cores get work.
    if m_p // tm <= 1 and n_p // tn <= 1 and n_p >= 256:
        tn = _divisor_tile(n_p, n_p // 2, 128)

    # Keep the double-buffered working set inside the scoped-VMEM budget.
    def _vmem_bytes(tm_, tn_, tk_):
        b = 2 * (tm_ * tk_ * x_it + tk_ * tn_ * w_it + tn_ * w_it) + 2 * tm_ * tn_ * o_it
        if k_p // tk_ > 1:
            b += tm_ * tn_ * 4              # f32 accumulator scratch
        return b

    while _vmem_bytes(tm, tn, tk) > _VMEM_BUDGET and tk > 128:
        tk = _divisor_tile(k_p, tk // 2, 128)
    while _vmem_bytes(tm, tn, tk) > _VMEM_BUDGET and tn > 128:
        tn = _divisor_tile(n_p, tn // 2, 128)
    while _vmem_bytes(tm, tn, tk) > _VMEM_BUDGET and tm > 8:
        tm = _divisor_tile(m_p, tm // 2, 8)

    m_blocks, n_blocks, k_blocks = m_p // tm, n_p // tn, k_p // tk

    # --- per-call padding: x only, M/K edges only ----------------------------
    if m_p != n or k_p != in_dim:
        x_p = jnp.pad(x2d, ((0, m_p - n), (0, k_p - in_dim)))
    else:
        x_p = x2d

    # --- cost hint (includes HBM re-read factors) ----------------------------
    cost = pl.CostEstimate(
        flops=2 * m_p * n_p * k_p,
        transcendentals=m_p * n_p,                      # one tanh per output elem
        bytes_accessed=(m_p * k_p * x_it * n_blocks     # x re-read per N block
                        + k_p * n_p * w_it * m_blocks   # W re-read per M block
                        + n_p * b_row.dtype.itemsize * m_blocks
                        + m_p * n_p * o_it),
    )

    if k_blocks == 1:
        out = pl.pallas_call(
            _logistic_kernel_single_k,
            out_shape=jax.ShapeDtypeStruct((m_p, n_p), out_dtype),
            grid_spec=pltpu.PrefetchScalarGridSpec(
                num_scalar_prefetch=0,
                grid=(m_blocks, n_blocks),
                in_specs=[
                    pl.BlockSpec((tm, tk), lambda i, j: (i, 0)),   # x
                    pl.BlockSpec((tk, tn), lambda i, j: (0, j)),   # W (K, N)
                    pl.BlockSpec((1, tn), lambda i, j: (0, j)),    # bias
                ],
                out_specs=pl.BlockSpec((tm, tn), lambda i, j: (i, j)),
            ),
            compiler_params=pltpu.CompilerParams(
                dimension_semantics=("parallel", "parallel")),
            cost_estimate=cost,
        )(x_p, w_kn, b_row)
    else:
        out = pl.pallas_call(
            _logistic_kernel_multi_k,
            out_shape=jax.ShapeDtypeStruct((m_p, n_p), out_dtype),
            grid_spec=pltpu.PrefetchScalarGridSpec(
                num_scalar_prefetch=0,
                grid=(m_blocks, n_blocks, k_blocks),
                in_specs=[
                    pl.BlockSpec((tm, tk), lambda i, j, k: (i, k)),   # x
                    pl.BlockSpec((tk, tn), lambda i, j, k: (k, j)),   # W (K, N)
                    pl.BlockSpec((1, tn), lambda i, j, k: (0, j)),    # bias
                ],
                out_specs=pl.BlockSpec((tm, tn), lambda i, j, k: (i, j)),
                scratch_shapes=[pltpu.VMEM((tm, tn), jnp.float32)],
            ),
            compiler_params=pltpu.CompilerParams(
                dimension_semantics=("parallel", "parallel", "arbitrary")),
            cost_estimate=cost,
        )(x_p, w_kn, b_row)

    return out[:n, :out_dim]


# ---------------------------------------------------------------------------
if __name__ == "__main__":
    key = jax.random.PRNGKey(0)
    k_x, k_p = jax.random.split(key)

    # Shapes consistent with the module: x is (N, C, H, W) flattened by
    # forward(); Logistic(in_dim=4*16*16=1024, out_dim=10).
    batch, c, h, w = 2, 4, 16, 16
    in_dim = c * h * w
    out_dim = 10

    x = jax.random.normal(k_x, (batch, c, h, w), jnp.float32)
    weight, bias = init_logistic_params(k_p, in_dim, out_dim)
    ref = jax.nn.sigmoid(x.reshape(batch, -1) @ weight.T + bias)

    # f32 path (single-K kernel: in_dim=1024 fits one block).
    w_kn, b_row = prepare_logistic_params(weight, bias)
    out = logistic_forward(x, w_kn, b_row, out_dim=out_dim)
    out = jax.block_until_ready(out)
    assert out.shape == (batch, out_dim)
    assert jnp.allclose(out, ref, atol=1e-4), "f32 mismatch vs reference"

    # bf16 operands (f32 accumulate + f32 epilogue inside the kernel).
    w_kn_bf, b_row_bf = prepare_logistic_params(weight.astype(jnp.bfloat16),
                                                bias.astype(jnp.bfloat16))
    out_bf16 = logistic_forward(x.astype(jnp.bfloat16), w_kn_bf, b_row_bf,
                                out_dim=out_dim)
    out_bf16 = jax.block_until_ready(out_bf16)
    assert out_bf16.shape == (batch, out_dim)
    assert jnp.allclose(out_bf16.astype(jnp.float32), ref, atol=2e-2), \
        "bf16 mismatch vs reference"

    # Exercise the multi-K accumulator path too (forces tk < K).
    out_mk = logistic_forward(x, w_kn, b_row, out_dim=out_dim, tile_k=512)
    out_mk = jax.block_until_ready(out_mk)
    assert jnp.allclose(out_mk, ref, atol=1e-4), "multi-K mismatch vs reference"

    print("KERNEL_OK")
</pallas_src>

<mosaic_0001>
module attributes {stable_mosaic.version = 11 : i64} {
  func.func @_logistic_kernel_single_k(%arg0: i32, %arg1: i32, %arg2: memref<8x1024xf32, #tpu.memory_space<vmem>>, %arg3: memref<1024x128xf32, #tpu.memory_space<vmem>>, %arg4: memref<1x128xf32, #tpu.memory_space<vmem>>, %arg5: memref<8x128xf32, #tpu.memory_space<vmem>>) attributes {dimension_semantics = [#tpu.dimension_semantics<parallel>, #tpu.dimension_semantics<parallel>], iteration_bounds = array<i64: 1, 1>, scalar_prefetch = 0 : i64, scratch_operands = 0 : i64, tpu.core_type = #tpu.core_type<tc>, window_params = [{transform_indices = @transform_0, window_bounds = array<i64: 8, 1024>}, {transform_indices = @transform_1, window_bounds = array<i64: 1024, 128>}, {transform_indices = @transform_2, window_bounds = array<i64: 1, 128>}, {transform_indices = @transform_3, window_bounds = array<i64: 8, 128>}]} {
    %c0 = arith.constant 0 : index
    %c0_0 = arith.constant 0 : index
    %0 = vector.load %arg2[%c0, %c0_0] : memref<8x1024xf32, #tpu.memory_space<vmem>>, vector<8x1024xf32>
    %c0_1 = arith.constant 0 : index
    %c0_2 = arith.constant 0 : index
    %1 = vector.load %arg3[%c0_1, %c0_2] : memref<1024x128xf32, #tpu.memory_space<vmem>>, vector<1024x128xf32>
    %cst = arith.constant dense<0.000000e+00> : vector<8x128xf32>
    %2 = tpu.matmul %0, %1, %cst {dimension_numbers = #tpu.dot_dimension_numbers<[1], [0], [0], [1], [0, 0, 1, 1], [], []>} : vector<8x1024xf32>, vector<1024x128xf32>, vector<8x128xf32> -> vector<8x128xf32>
    %c0_3 = arith.constant 0 : index
    %c0_4 = arith.constant 0 : index
    %3 = vector.load %arg4[%c0_3, %c0_4] : memref<1x128xf32, #tpu.memory_space<vmem>>, vector<1x128xf32>
    %4 = vector.broadcast %3 : vector<1x128xf32> to vector<8x128xf32>
    %5 = arith.addf %2, %4 : vector<8x128xf32>
    %cst_5 = arith.constant 5.000000e-01 : f32
    %6 = vector.broadcast %cst_5 : f32 to vector<8x128xf32>
    %7 = arith.mulf %6, %5 : vector<8x128xf32>
    %8 = math.tanh %7 : vector<8x128xf32>
    %cst_6 = arith.constant 5.000000e-01 : f32
    %9 = vector.broadcast %cst_6 : f32 to vector<8x128xf32>
    %10 = arith.mulf %9, %8 : vector<8x128xf32>
    %cst_7 = arith.constant 5.000000e-01 : f32
    %11 = vector.broadcast %cst_7 : f32 to vector<8x128xf32>
    %12 = arith.addf %10, %11 : vector<8x128xf32>
    %c0_8 = arith.constant 0 : index
    %c0_9 = arith.constant 0 : index
    %13 = vector.load %arg5[%c0_8, %c0_9] : memref<8x128xf32, #tpu.memory_space<vmem>>, vector<8x128xf32>
    tpu.vector_store %arg5[%c0_8, %c0_9], %12 {strides = array<i32>} : memref<8x128xf32, #tpu.memory_space<vmem>>, vector<8x128xf32>,
    return
  }
  func.func @transform_0(%arg0: i32, %arg1: i32) -> (i32, i32) {
    %c0_i32 = arith.constant 0 : i32
    %c0_i32_0 = arith.constant 0 : i32
    return %arg0, %c0_i32 : i32, i32
  }
  func.func @transform_1(%arg0: i32, %arg1: i32) -> (i32, i32) {
    %c0_i32 = arith.constant 0 : i32
    %c0_i32_0 = arith.constant 0 : i32
    return %c0_i32, %arg1 : i32, i32
  }
  func.func @transform_2(%arg0: i32, %arg1: i32) -> (i32, i32) {
    %c0_i32 = arith.constant 0 : i32
    %c0_i32_0 = arith.constant 0 : i32
    return %c0_i32, %arg1 : i32, i32
  }
  func.func @transform_3(%arg0: i32, %arg1: i32) -> (i32, i32) {
    %c0_i32 = arith.constant 0 : i32
    return %arg0, %arg1 : i32, i32
  }
}

</mosaic_0001>

<llo_original>
// kernel: logistic_forward.1
$region0: #{logistic_forward.1}
  #allocation0 [shape = 'u32[]', space=smem, size = 0x4, offset = 0x4, fixed_abs, tag = 'smem constant byte address 0x4 - core index']
  #allocation1 [shape = 'u32[144,128]{1,0:T(1,128)}', space=vmem, size = 0x12000, scoped, tag = 'internal scratch']
  %s0 = inlined_call_operand.vmem [shape: f32[8,1024], index: 0, kind: input, shape index: {}]
  %s1 = inlined_call_operand.hbm [shape: f32[1024,128], index: 1, kind: input, shape index: {}]
  %s2 = inlined_call_operand.vmem [shape: f32[1,128], index: 2, kind: input, shape index: {}]
  %s3 = inlined_call_operand.vmem [shape: f32[8,128], index: 3, kind: output, shape index: {}]
  %s4 = sld [smem:[#allocation0]]
  $region26: #{logistic_forward.1} parent=0
    _
  %s6 = ssub.s32 1, %s4
  %s7 = scalar_select 0, %s6, %s4
  $region1: #{logistic_forward.1} parent=0
    #allocation2 [shape = 'u8[524288]{0}', space=vmem, size = 0x80000, scoped, tag = 'input window, operand 1, single buffered']
    #allocation3 [shape = 's32[1]{0}', space=sflag, size = 0x4, scoped, tag = 'scoped memory for logistic_forward.1']
    %8 = vsyncpa [#allocation3], 0
    // Predicated region
    $region2: #{logistic_forward.1} parent=1 // pred_check
      _
    $region3: #{logistic_forward.1} parent=1 // pred_check_branch
      %10 = sbr.rel (0) target = $region5
    $region4: #{logistic_forward.1} parent=1 // pred_region
      _
    $region5: #{logistic_forward.1} parent=1 // pred_fallthru
      _
    // Predicated region
    $region6: #{logistic_forward.1} parent=1 // pred_check
      _
    $region7: #{logistic_forward.1} parent=1 // pred_check_branch
      %12 = sbr.rel (0) target = $region9
    $region8: #{logistic_forward.1} parent=1 // pred_region
      %s14 = ssub.s32 16384, 16384
      %15 = vsyncadd [#allocation3], %s14
      %s16 = sshll.u32 [#allocation2], 4
      %s17 = int_to_ptr.vmem [resolvable:$true] %s16
      %22 = dma.hbm_to_vmem [thread:$0]  %s1, 16384, %s17, [#allocation3], 128, 128, 8
    $region9: #{logistic_forward.1} parent=1 // pred_fallthru
      _
    // Predicated region
    $region10: #{logistic_forward.1} parent=1 // pred_check
      _
    $region11: #{logistic_forward.1} parent=1 // pred_check_branch
      %24 = sbr.rel (0) target = $region13
    $region12: #{logistic_forward.1} parent=1 // pred_region
      _
    $region13: #{logistic_forward.1} parent=1 // pred_fallthru
      _
    // Predicated region
    $region14: #{logistic_forward.1} parent=1 // pred_check
      _
    $region15: #{logistic_forward.1} parent=1 // pred_check_branch
      %26 = sbr.rel (0) target = $region17
    $region16: #{logistic_forward.1} parent=1 // pred_region
      %27 = dma.done [#allocation3], 16384
    $region17: #{logistic_forward.1} parent=1 // pred_fallthru
      _
    %v28 = vld [vmem:[%s0] sm:$0xff]
    %v29 = vld [vmem:[%s0 + $0x8] sm:$0xff]
    %v30 = vld [vmem:[%s0 + $0x10] sm:$0xff]
    %v31 = vld [vmem:[%s0 + $0x18] sm:$0xff]
    %v32 = vld [vmem:[%s0 + $0x20] sm:$0xff]
    %v33 = vld [vmem:[%s0 + $0x28] sm:$0xff]
    %v34 = vld [vmem:[%s0 + $0x30] sm:$0xff]
    %v35 = vld [vmem:[%s0 + $0x38] sm:$0xff]
    %v36 = vld [vmem:[#allocation2] sm:$0xff]
    %v37 = vld [vmem:[#allocation2 + $0x8] sm:$0xff]
    %v38 = vld [vmem:[#allocation2 + $0x10] sm:$0xff]
    %v39 = vld [vmem:[#allocation2 + $0x18] sm:$0xff]
    %v40 = vld [vmem:[#allocation2 + $0x20] sm:$0xff]
    %v41 = vld [vmem:[#allocation2 + $0x28] sm:$0xff]
    %v42 = vld [vmem:[#allocation2 + $0x30] sm:$0xff]
    %v43 = vld [vmem:[#allocation2 + $0x38] sm:$0xff]
    %v44 = vld [vmem:[#allocation2 + $0x40] sm:$0xff]
    %v45 = vld [vmem:[#allocation2 + $0x48] sm:$0xff]
    %v46 = vld [vmem:[#allocation2 + $0x50] sm:$0xff]
    %v47 = vld [vmem:[#allocation2 + $0x58] sm:$0xff]
    %v48 = vld [vmem:[#allocation2 + $0x60] sm:$0xff]
    %v49 = vld [vmem:[#allocation2 + $0x68] sm:$0xff]
    %v50 = vld [vmem:[#allocation2 + $0x70] sm:$0xff]
    %v51 = vld [vmem:[#allocation2 + $0x78] sm:$0xff]
    %v52 = vld [vmem:[#allocation2 + $0x80] sm:$0xff]
    %v53 = vld [vmem:[#allocation2 + $0x88] sm:$0xff]
    %v54 = vld [vmem:[#allocation2 + $0x90] sm:$0xff]
    %v55 = vld [vmem:[#allocation2 + $0x98] sm:$0xff]
    %v56 = vld [vmem:[#allocation2 + $0xa0] sm:$0xff]
    %v57 = vld [vmem:[#allocation2 + $0xa8] sm:$0xff]
    %v58 = vld [vmem:[#allocation2 + $0xb0] sm:$0xff]
    %v59 = vld [vmem:[#allocation2 + $0xb8] sm:$0xff]
    %v60 = vld [vmem:[#allocation2 + $0xc0] sm:$0xff]
    %v61 = vld [vmem:[#allocation2 + $0xc8] sm:$0xff]
    %v62 = vld [vmem:[#allocation2 + $0xd0] sm:$0xff]
    %v63 = vld [vmem:[#allocation2 + $0xd8] sm:$0xff]
    %v64 = vld [vmem:[#allocation2 + $0xe0] sm:$0xff]
    %v65 = vld [vmem:[#allocation2 + $0xe8] sm:$0xff]
    %v66 = vld [vmem:[#allocation2 + $0xf0] sm:$0xff]
    %v67 = vld [vmem:[#allocation2 + $0xf8] sm:$0xff]
    %v68 = vld [vmem:[#allocation2 + $0x100] sm:$0xff]
    %v69 = vld [vmem:[#allocation2 + $0x108] sm:$0xff]
    %v70 = vld [vmem:[#allocation2 + $0x110] sm:$0xff]
    %v71 = vld [vmem:[#allocation2 + $0x118] sm:$0xff]
    %v72 = vld [vmem:[#allocation2 + $0x120] sm:$0xff]
    %v73 = vld [vmem:[#allocation2 + $0x128] sm:$0xff]
    %v74 = vld [vmem:[#allocation2 + $0x130] sm:$0xff]
    %v75 = vld [vmem:[#allocation2 + $0x138] sm:$0xff]
    %v76 = vld [vmem:[#allocation2 + $0x140] sm:$0xff]
    %v77 = vld [vmem:[#allocation2 + $0x148] sm:$0xff]
    %v78 = vld [vmem:[#allocation2 + $0x150] sm:$0xff]
    %v79 = vld [vmem:[#allocation2 + $0x158] sm:$0xff]
    %v80 = vld [vmem:[#allocation2 + $0x160] sm:$0xff]
    %v81 = vld [vmem:[#allocation2 + $0x168] sm:$0xff]
    %v82 = vld [vmem:[#allocation2 + $0x170] sm:$0xff]
    %v83 = vld [vmem:[#allocation2 + $0x178] sm:$0xff]
    %v84 = vld [vmem:[#allocation2 + $0x180] sm:$0xff]
    %v85 = vld [vmem:[#allocation2 + $0x188] sm:$0xff]
    %v86 = vld [vmem:[#allocation2 + $0x190] sm:$0xff]
    %v87 = vld [vmem:[#allocation2 + $0x198] sm:$0xff]
    %v88 = vld [vmem:[#allocation2 + $0x1a0] sm:$0xff]
    %v89 = vld [vmem:[#allocation2 + $0x1a8] sm:$0xff]
    %v90 = vld [vmem:[#allocation2 + $0x1b0] sm:$0xff]
    %v91 = vld [vmem:[#allocation2 + $0x1b8] sm:$0xff]
    %v92 = vld [vmem:[#allocation2 + $0x1c0] sm:$0xff]
    %v93 = vld [vmem:[#allocation2 + $0x1c8] sm:$0xff]
    %v94 = vld [vmem:[#allocation2 + $0x1d0] sm:$0xff]
    %v95 = vld [vmem:[#allocation2 + $0x1d8] sm:$0xff]
    %v96 = vld [vmem:[#allocation2 + $0x1e0] sm:$0xff]
    %v97 = vld [vmem:[#allocation2 + $0x1e8] sm:$0xff]
    %v98 = vld [vmem:[#allocation2 + $0x1f0] sm:$0xff]
    %v99 = vld [vmem:[#allocation2 + $0x1f8] sm:$0xff]
    %v100 = vld [vmem:[#allocation2 + $0x200] sm:$0xff]
    %v101 = vld [vmem:[#allocation2 + $0x208] sm:$0xff]
    %v102 = vld [vmem:[#allocation2 + $0x210] sm:$0xff]
    %v103 = vld [vmem:[#allocation2 + $0x218] sm:$0xff]
    %v104 = vld [vmem:[#allocation2 + $0x220] sm:$0xff]
    %v105 = vld [vmem:[#allocation2 + $0x228] sm:$0xff]
    %v106 = vld [vmem:[#allocation2 + $0x230] sm:$0xff]
    %v107 = vld [vmem:[#allocation2 + $0x238] sm:$0xff]
    %v108 = vld [vmem:[#allocation2 + $0x240] sm:$0xff]
    %v109 = vld [vmem:[#allocation2 + $0x248] sm:$0xff]
    %v110 = vld [vmem:[#allocation2 + $0x250] sm:$0xff]
    %v111 = vld [vmem:[#allocation2 + $0x258] sm:$0xff]
    %v112 = vld [vmem:[#allocation2 + $0x260] sm:$0xff]
    %v113 = vld [vmem:[#allocation2 + $0x268] sm:$0xff]
    %v114 = vld [vmem:[#allocation2 + $0x270] sm:$0xff]
    %v115 = vld [vmem:[#allocation2 + $0x278] sm:$0xff]
    %v116 = vld [vmem:[#allocation2 + $0x280] sm:$0xff]
    %v117 = vld [vmem:[#allocation2 + $0x288] sm:$0xff]
    %v118 = vld [vmem:[#allocation2 + $0x290] sm:$0xff]
    %v119 = vld [vmem:[#allocation2 + $0x298] sm:$0xff]
    %v120 = vld [vmem:[#allocation2 + $0x2a0] sm:$0xff]
    %v121 = vld [vmem:[#allocation2 + $0x2a8] sm:$0xff]
    %v122 = vld [vmem:[#allocation2 + $0x2b0] sm:$0xff]
    %v123 = vld [vmem:[#allocation2 + $0x2b8] sm:$0xff]
    %v124 = vld [vmem:[#allocation2 + $0x2c0] sm:$0xff]
    %v125 = vld [vmem:[#allocation2 + $0x2c8] sm:$0xff]
    %v126 = vld [vmem:[#allocation2 + $0x2d0] sm:$0xff]
    %v127 = vld [vmem:[#allocation2 + $0x2d8] sm:$0xff]
    %v128 = vld [vmem:[#allocation2 + $0x2e0] sm:$0xff]
    %v129 = vld [vmem:[#allocation2 + $0x2e8] sm:$0xff]
    %v130 = vld [vmem:[#allocation2 + $0x2f0] sm:$0xff]
    %v131 = vld [vmem:[#allocation2 + $0x2f8] sm:$0xff]
    %v132 = vld [vmem:[#allocation2 + $0x300] sm:$0xff]
    %v133 = vld [vmem:[#allocation2 + $0x308] sm:$0xff]
    %v134 = vld [vmem:[#allocation2 + $0x310] sm:$0xff]
    %v135 = vld [vmem:[#allocation2 + $0x318] sm:$0xff]
    %v136 = vld [vmem:[#allocation2 + $0x320] sm:$0xff]
    %v137 = vld [vmem:[#allocation2 + $0x328] sm:$0xff]
    %v138 = vld [vmem:[#allocation2 + $0x330] sm:$0xff]
    %v139 = vld [vmem:[#allocation2 + $0x338] sm:$0xff]
    %v140 = vld [vmem:[#allocation2 + $0x340] sm:$0xff]
    %v141 = vld [vmem:[#allocation2 + $0x348] sm:$0xff]
    %v142 = vld [vmem:[#allocation2 + $0x350] sm:$0xff]
    %v143 = vld [vmem:[#allocation2 + $0x358] sm:$0xff]
    %v144 = vld [vmem:[#allocation2 + $0x360] sm:$0xff]
    %v145 = vld [vmem:[#allocation2 + $0x368] sm:$0xff]
    %v146 = vld [vmem:[#allocation2 + $0x370] sm:$0xff]
    %v147 = vld [vmem:[#allocation2 + $0x378] sm:$0xff]
    %v148 = vld [vmem:[#allocation2 + $0x380] sm:$0xff]
    %v149 = vld [vmem:[#allocation2 + $0x388] sm:$0xff]
    %v150 = vld [vmem:[#allocation2 + $0x390] sm:$0xff]
    %v151 = vld [vmem:[#allocation2 + $0x398] sm:$0xff]
    %v152 = vld [vmem:[#allocation2 + $0x3a0] sm:$0xff]
    %v153 = vld [vmem:[#allocation2 + $0x3a8] sm:$0xff]
    %v154 = vld [vmem:[#allocation2 + $0x3b0] sm:$0xff]
    %v155 = vld [vmem:[#allocation2 + $0x3b8] sm:$0xff]
    %v156 = vld [vmem:[#allocation2 + $0x3c0] sm:$0xff]
    %v157 = vld [vmem:[#allocation2 + $0x3c8] sm:$0xff]
    %v158 = vld [vmem:[#allocation2 + $0x3d0] sm:$0xff]
    %v159 = vld [vmem:[#allocation2 + $0x3d8] sm:$0xff]
    %v160 = vld [vmem:[#allocation2 + $0x3e0] sm:$0xff]
    %v161 = vld [vmem:[#allocation2 + $0x3e8] sm:$0xff]
    %v162 = vld [vmem:[#allocation2 + $0x3f0] sm:$0xff]
    %v163 = vld [vmem:[#allocation2 + $0x3f8] sm:$0xff]
    %v164 = vld [vmem:[%s2] sm:$0x1]
    %v166 = vlaneseq
    %v167 = vshrl.u32 %v166, 7
    %v168 = vsub.s32 0, %v167
    %v169 = vrot.slane %v164, %v168
    %171 = vmatprep.subr.mxu0 0.0
    %172 = vmatpush1.msra.mxu0 %v51
    %173 = vmatprep.subr.mxu0 0.0
    %174 = vmatpush1.msra.mxu0 %v50
    %175 = vmatprep.subr.mxu0 0.0
    %176 = vmatpush1.msra.mxu0 %v49
    %177 = vmatprep.subr.mxu0 0.0
    %178 = vmatpush1.msra.mxu0 %v48
    %179 = vmatprep.subr.mxu0 0.0
    %180 = vmatpush1.msra.mxu0 %v47
    %181 = vmatprep.subr.mxu0 0.0
    %182 = vmatpush1.msra.mxu0 %v46
    %183 = vmatprep.subr.mxu0 0.0
    %184 = vmatpush1.msra.mxu0 %v45
    %185 = vmatprep.subr.mxu0 0.0
    %186 = vmatpush1.msra.mxu0 %v44
    %187 = vmatprep.subr.mxu0 0.0
    %188 = vmatpush1.msra.mxu0 %v43
    %189 = vmatprep.subr.mxu0 0.0
    %190 = vmatpush1.msra.mxu0 %v42
    %191 = vmatprep.subr.mxu0 0.0
    %192 = vmatpush1.msra.mxu0 %v41
    %193 = vmatprep.subr.mxu0 0.0
    %194 = vmatpush1.msra.mxu0 %v40
    %195 = vmatprep.subr.mxu0 0.0
    %196 = vmatpush1.msra.mxu0 %v39
    %197 = vmatprep.subr.mxu0 0.0
    %198 = vmatpush1.msra.mxu0 %v38
    %199 = vmatprep.subr.mxu0 0.0
    %200 = vmatpush1.msra.mxu0 %v37
    %201 = vmatprep.subr.mxu0 0.0
    %202 = vmatpush1.msra.mxu0 %v36
    %203 = vmatprep.subr.mxu0 0.0
    %204 = vmatpush2.msra.mxu0 %v67
    %205 = vmatprep.subr.mxu0 0.0
    %206 = vmatpush2.msra.mxu0 %v66
    %207 = vmatprep.subr.mxu0 0.0
    %208 = vmatpush2.msra.mxu0 %v65
    %209 = vmatprep.subr.mxu0 0.0
    %210 = vmatpush2.msra.mxu0 %v64
    %211 = vmatprep.subr.mxu0 0.0
    %212 = vmatpush2.msra.mxu0 %v63
    %213 = vmatprep.subr.mxu0 0.0
    %214 = vmatpush2.msra.mxu0 %v62
    %215 = vmatprep.subr.mxu0 0.0
    %216 = vmatpush2.msra.mxu0 %v61
    %217 = vmatprep.subr.mxu0 0.0
    %218 = vmatpush2.msra.mxu0 %v60
    %219 = vmatprep.subr.mxu0 0.0
    %220 = vmatpush2.msra.mxu0 %v59
    %221 = vmatprep.subr.mxu0 0.0
    %222 = vmatpush2.msra.mxu0 %v58
    %223 = vmatprep.subr.mxu0 0.0
    %224 = vmatpush2.msra.mxu0 %v57
    %225 = vmatprep.subr.mxu0 0.0
    %226 = vmatpush2.msra.mxu0 %v56
    %227 = vmatprep.subr.mxu0 0.0
    %228 = vmatpush2.msra.mxu0 %v55
    %229 = vmatprep.subr.mxu0 0.0
    %230 = vmatpush2.msra.mxu0 %v54
    %231 = vmatprep.subr.mxu0 0.0
    %232 = vmatpush2.msra.mxu0 %v53
    %233 = vmatprep.subr.mxu0 0.0
    %234 = vmatpush2.msra.mxu0 %v52
    %235 = vmatprep.mubr.f32.mxu0 %v29
    %236 = vmatmul.mubr.f32.gmra.mxu0 %v28
    %v237 = vpop.f32.mrf.mxu0
    %v238 = vadd.f32 %v169, %v237
    %v239 = vpop.f32.mrf.mxu0
    %240 = vdwg.mxu0
    %241 = vmatprep.subr.mxu0 0.0
    %242 = vmatpush1.msra.mxu0 %v83
    %243 = vmatprep.subr.mxu0 0.0
    %244 = vmatpush1.msra.mxu0 %v82
    %245 = vmatprep.subr.mxu0 0.0
    %246 = vmatpush1.msra.mxu0 %v81
    %247 = vmatprep.subr.mxu0 0.0
    %248 = vmatpush1.msra.mxu0 %v80
    %249 = vmatprep.subr.mxu0 0.0
    %250 = vmatpush1.msra.mxu0 %v79
    %251 = vmatprep.subr.mxu0 0.0
    %252 = vmatpush1.msra.mxu0 %v78
    %253 = vmatprep.subr.mxu0 0.0
    %254 = vmatpush1.msra.mxu0 %v77
    %255 = vmatprep.subr.mxu0 0.0
    %256 = vmatpush1.msra.mxu0 %v76
    %257 = vmatprep.subr.mxu0 0.0
    %258 = vmatpush1.msra.mxu0 %v75
    %259 = vmatprep.subr.mxu0 0.0
    %260 = vmatpush1.msra.mxu0 %v74
    %261 = vmatprep.subr.mxu0 0.0
    %262 = vmatpush1.msra.mxu0 %v73
    %263 = vmatprep.subr.mxu0 0.0
    %264 = vmatpush1.msra.mxu0 %v72
    %265 = vmatprep.subr.mxu0 0.0
    %266 = vmatpush1.msra.mxu0 %v71
    %267 = vmatprep.subr.mxu0 0.0
    %268 = vmatpush1.msra.mxu0 %v70
    %269 = vmatprep.subr.mxu0 0.0
    %270 = vmatpush1.msra.mxu0 %v69
    %271 = vmatprep.subr.mxu0 0.0
    %272 = vmatpush1.msra.mxu0 %v68
    %273 = vmatprep.subr.mxu0 0.0
    %274 = vmatpush2.msra.mxu0 %v99
    %275 = vmatprep.subr.mxu0 0.0
    %276 = vmatpush2.msra.mxu0 %v98
    %277 = vmatprep.subr.mxu0 0.0
    %278 = vmatpush2.msra.mxu0 %v97
    %279 = vmatprep.subr.mxu0 0.0
    %280 = vmatpush2.msra.mxu0 %v96
    %281 = vmatprep.subr.mxu0 0.0
    %282 = vmatpush2.msra.mxu0 %v95
    %283 = vmatprep.subr.mxu0 0.0
    %284 = vmatpush2.msra.mxu0 %v94
    %285 = vmatprep.subr.mxu0 0.0
    %286 = vmatpush2.msra.mxu0 %v93
    %287 = vmatprep.subr.mxu0 0.0
    %288 = vmatpush2.msra.mxu0 %v92
    %289 = vmatprep.subr.mxu0 0.0
    %290 = vmatpush2.msra.mxu0 %v91
    %291 = vmatprep.subr.mxu0 0.0
    %292 = vmatpush2.msra.mxu0 %v90
    %293 = vmatprep.subr.mxu0 0.0
    %294 = vmatpush2.msra.mxu0 %v89
    %295 = vmatprep.subr.mxu0 0.0
    %296 = vmatpush2.msra.mxu0 %v88
    %297 = vmatprep.subr.mxu0 0.0
    %298 = vmatpush2.msra.mxu0 %v87
    %299 = vmatprep.subr.mxu0 0.0
    %300 = vmatpush2.msra.mxu0 %v86
    %301 = vmatprep.subr.mxu0 0.0
    %302 = vmatpush2.msra.mxu0 %v85
    %303 = vmatprep.subr.mxu0 0.0
    %304 = vmatpush2.msra.mxu0 %v84
    %305 = vmatprep.mubr.f32.mxu0 %v31
    %306 = vmatmul.mubr.f32.gmra.mxu0 %v30
    %v307 = vpop.f32.mrf.mxu0
    %v308 = vadd.f32 %v238, %v307
    %v309 = vpop.f32.mrf.mxu0
    %310 = vdwg.mxu0
    %311 = vmatprep.subr.mxu0 0.0
    %312 = vmatpush1.msra.mxu0 %v115
    %313 = vmatprep.subr.mxu0 0.0
    %314 = vmatpush1.msra.mxu0 %v114
    %315 = vmatprep.subr.mxu0 0.0
    %316 = vmatpush1.msra.mxu0 %v113
    %317 = vmatprep.subr.mxu0 0.0
    %318 = vmatpush1.msra.mxu0 %v112
    %319 = vmatprep.subr.mxu0 0.0
    %320 = vmatpush1.msra.mxu0 %v111
    %321 = vmatprep.subr.mxu0 0.0
    %322 = vmatpush1.msra.mxu0 %v110
    %323 = vmatprep.subr.mxu0 0.0
    %324 = vmatpush1.msra.mxu0 %v109
    %325 = vmatprep.subr.mxu0 0.0
    %326 = vmatpush1.msra.mxu0 %v108
    %327 = vmatprep.subr.mxu0 0.0
    %328 = vmatpush1.msra.mxu0 %v107
    %329 = vmatprep.subr.mxu0 0.0
    %330 = vmatpush1.msra.mxu0 %v106
    %331 = vmatprep.subr.mxu0 0.0
    %332 = vmatpush1.msra.mxu0 %v105
    %333 = vmatprep.subr.mxu0 0.0
    %334 = vmatpush1.msra.mxu0 %v104
    %335 = vmatprep.subr.mxu0 0.0
    %336 = vmatpush1.msra.mxu0 %v103
    %337 = vmatprep.subr.mxu0 0.0
    %338 = vmatpush1.msra.mxu0 %v102
    %339 = vmatprep.subr.mxu0 0.0
    %340 = vmatpush1.msra.mxu0 %v101
    %341 = vmatprep.subr.mxu0 0.0
    %342 = vmatpush1.msra.mxu0 %v100
    %343 = vmatprep.subr.mxu0 0.0
    %344 = vmatpush2.msra.mxu0 %v131
    %345 = vmatprep.subr.mxu0 0.0
    %346 = vmatpush2.msra.mxu0 %v130
    %347 = vmatprep.subr.mxu0 0.0
    %348 = vmatpush2.msra.mxu0 %v129
    %349 = vmatprep.subr.mxu0 0.0
    %350 = vmatpush2.msra.mxu0 %v128
    %351 = vmatprep.subr.mxu0 0.0
    %352 = vmatpush2.msra.mxu0 %v127
    %353 = vmatprep.subr.mxu0 0.0
    %354 = vmatpush2.msra.mxu0 %v126
    %355 = vmatprep.subr.mxu0 0.0
    %356 = vmatpush2.msra.mxu0 %v125
    %357 = vmatprep.subr.mxu0 0.0
    %358 = vmatpush2.msra.mxu0 %v124
    %359 = vmatprep.subr.mxu0 0.0
    %360 = vmatpush2.msra.mxu0 %v123
    %361 = vmatprep.subr.mxu0 0.0
    %362 = vmatpush2.msra.mxu0 %v122
    %363 = vmatprep.subr.mxu0 0.0
    %364 = vmatpush2.msra.mxu0 %v121
    %365 = vmatprep.subr.mxu0 0.0
    %366 = vmatpush2.msra.mxu0 %v120
    %367 = vmatprep.subr.mxu0 0.0
    %368 = vmatpush2.msra.mxu0 %v119
    %369 = vmatprep.subr.mxu0 0.0
    %370 = vmatpush2.msra.mxu0 %v118
    %371 = vmatprep.subr.mxu0 0.0
    %372 = vmatpush2.msra.mxu0 %v117
    %373 = vmatprep.subr.mxu0 0.0
    %374 = vmatpush2.msra.mxu0 %v116
    %375 = vmatprep.mubr.f32.mxu0 %v33
    %376 = vmatmul.mubr.f32.gmra.mxu0 %v32
    %v377 = vpop.f32.mrf.mxu0
    %v378 = vadd.f32 %v308, %v377
    %v379 = vpop.f32.mrf.mxu0
    %380 = vdwg.mxu0
    %381 = vmatprep.subr.mxu0 0.0
    %382 = vmatpush1.msra.mxu0 %v147
    %383 = vmatprep.subr.mxu0 0.0
    %384 = vmatpush1.msra.mxu0 %v146
    %385 = vmatprep.subr.mxu0 0.0
    %386 = vmatpush1.msra.mxu0 %v145
    %387 = vmatprep.subr.mxu0 0.0
    %388 = vmatpush1.msra.mxu0 %v144
    %389 = vmatprep.subr.mxu0 0.0
    %390 = vmatpush1.msra.mxu0 %v143
    %391 = vmatprep.subr.mxu0 0.0
    %392 = vmatpush1.msra.mxu0 %v142
    %393 = vmatprep.subr.mxu0 0.0
    %394 = vmatpush1.msra.mxu0 %v141
    %395 = vmatprep.subr.mxu0 0.0
    %396 = vmatpush1.msra.mxu0 %v140
    %397 = vmatprep.subr.mxu0 0.0
    %398 = vmatpush1.msra.mxu0 %v139
    %399 = vmatprep.subr.mxu0 0.0
    %400 = vmatpush1.msra.mxu0 %v138
    %401 = vmatprep.subr.mxu0 0.0
    %402 = vmatpush1.msra.mxu0 %v137
    %403 = vmatprep.subr.mxu0 0.0
    %404 = vmatpush1.msra.mxu0 %v136
    %405 = vmatprep.subr.mxu0 0.0
    %406 = vmatpush1.msra.mxu0 %v135
    %407 = vmatprep.subr.mxu0 0.0
    %408 = vmatpush1.msra.mxu0 %v134
    %409 = vmatprep.subr.mxu0 0.0
    %410 = vmatpush1.msra.mxu0 %v133
    %411 = vmatprep.subr.mxu0 0.0
    %412 = vmatpush1.msra.mxu0 %v132
    %413 = vmatprep.subr.mxu0 0.0
    %414 = vmatpush2.msra.mxu0 %v163
    %415 = vmatprep.subr.mxu0 0.0
    %416 = vmatpush2.msra.mxu0 %v162
    %417 = vmatprep.subr.mxu0 0.0
    %418 = vmatpush2.msra.mxu0 %v161
    %419 = vmatprep.subr.mxu0 0.0
    %420 = vmatpush2.msra.mxu0 %v160
    %421 = vmatprep.subr.mxu0 0.0
    %422 = vmatpush2.msra.mxu0 %v159
    %423 = vmatprep.subr.mxu0 0.0
    %424 = vmatpush2.msra.mxu0 %v158
    %425 = vmatprep.subr.mxu0 0.0
    %426 = vmatpush2.msra.mxu0 %v157
    %427 = vmatprep.subr.mxu0 0.0
    %428 = vmatpush2.msra.mxu0 %v156
    %429 = vmatprep.subr.mxu0 0.0
    %430 = vmatpush2.msra.mxu0 %v155
    %431 = vmatprep.subr.mxu0 0.0
    %432 = vmatpush2.msra.mxu0 %v154
    %433 = vmatprep.subr.mxu0 0.0
    %434 = vmatpush2.msra.mxu0 %v153
    %435 = vmatprep.subr.mxu0 0.0
    %436 = vmatpush2.msra.mxu0 %v152
    %437 = vmatprep.subr.mxu0 0.0
    %438 = vmatpush2.msra.mxu0 %v151
    %439 = vmatprep.subr.mxu0 0.0
    %440 = vmatpush2.msra.mxu0 %v150
    %441 = vmatprep.subr.mxu0 0.0
    %442 = vmatpush2.msra.mxu0 %v149
    %443 = vmatprep.subr.mxu0 0.0
    %444 = vmatpush2.msra.mxu0 %v148
    %445 = vmatprep.mubr.f32.mxu0 %v35
    %446 = vmatmul.mubr.f32.gmra.mxu0 %v34
    %v447 = vpop.f32.mrf.mxu0
    %v448 = vadd.f32 %v378, %v447
    %v449 = vpop.f32.mrf.mxu0
    %450 = vdwg.mxu0
    %v451 = vmul.f32 %v448, 0.5
    %v452 = vtanh.pop %v451
    %v453 = vmul.f32 %v452, 0.5
    %v454 = vadd.f32 %v453, 0.5
    %455 = vst [vmem:[%s3] sm:$0xff] %v454
    // Predicated region
    $region18: #{logistic_forward.1} parent=1 // pred_check
      _
    $region19: #{logistic_forward.1} parent=1 // pred_check_branch
      %457 = sbr.rel (0) target = $region21
    $region20: #{logistic_forward.1} parent=1 // pred_region
      _
    $region21: #{logistic_forward.1} parent=1 // pred_fallthru
      _
    // Predicated region
    $region22: #{logistic_forward.1} parent=1 // pred_check
      _
    $region23: #{logistic_forward.1} parent=1 // pred_check_branch
      %459 = sbr.rel (0) target = $region25
    $region24: #{logistic_forward.1} parent=1 // pred_region
      _
    $region25: #{logistic_forward.1} parent=1 // pred_fallthru
      _
    %460 = vsyncpa [#allocation3], 1

</llo_original>
